<compile_context>
chip_gen: v7x
topology: tpu7x:2x2x1
jax: 0.10.0
libtpu: 0.0.40
codegen_flags: <defaults>
</compile_context>

<pallas_src>
import math

import jax
import jax.numpy as jnp
from jax.experimental import pallas as pl
from jax.experimental.pallas import tpu as pltpu


# ------------------------- (8,128) parameter slab layout -------------------------
# All offsets static, every block within rows 0:8 (one sublane tile).
#   x_bcast : rows 0:3, lanes  0:12   input x broadcast along lanes   [per call]
#   W0T     : rows 0:3, lanes 16:28   weight_ih_l0^T            (3,12)
#   B0      : row  3  , lanes 16:28   bias_ih_l0 + bias_hh_l0   (1,12)
#   W1SIG   : rows 0:6, lanes 32:35   [W_ih_l1[i-gate]; W_ih_l1[o-gate]]  (6,3)
#   B1SIG   : rows 0:6, lanes 36:37   matching biases, column   (6,1)
#   W1TANH  : rows 0:3, lanes 40:43   W_ih_l1[g-gate]           (3,3)
#   B1TANH  : rows 0:3, lanes 44:45   matching biases, column   (3,1)
#   FW1T    : rows 0:3, lanes 48:58   fc1.weight^T              (3,10)
#   FB1     : row  3  , lanes 48:58   fc1.bias                  (1,10)
#   FW2     : rows 0:5, lanes 64:74   fc2.weight (PyTorch)      (5,10)
#   FB2     : rows 0:5, lanes 76:77   fc2.bias, column          (5,1)
#   FW3C    : rows 0:5, lanes 80:81   fc3.weight, column        (5,1)
#   FB3     : row  5  , lanes 80:81   fc3.bias                  (1,1)


def net_kernel(slab_ref, o_ref):
    # ---- LSTM layer 0 (h0 = c0 = 0): gates = W_ih0 @ x + (b_ih + b_hh) ----
    xb = slab_ref[0:3, 0:12]                          # (3,12) x pre-broadcast
    w0t = slab_ref[0:3, 16:28]                        # (3,12)
    b0 = slab_ref[3:4, 16:28]                         # (1,12)
    g0 = jnp.sum(xb * w0t, axis=0, keepdims=True) + b0   # (1,12) lane row
    s0 = jax.nn.sigmoid(g0)                           # one EUP pass, all 12 gates
    t0 = jnp.tanh(g0)
    i0, gg0, o0 = s0[:, 0:3], t0[:, 6:9], s0[:, 9:12]     # gate order i,f,g,o
    c0 = i0 * gg0                                     # forget gate dead (c_prev = 0)
    h1 = o0 * jnp.tanh(c0)                            # (1,3) lane row

    # ---- LSTM layer 1: weights split by activation so all slices stay in rows 0:8 ----
    h1b = jnp.broadcast_to(h1, (6, 3))                # sublane broadcast
    g1s = (jnp.sum(h1b * slab_ref[0:6, 32:35], axis=1, keepdims=True)
           + slab_ref[0:6, 36:37])                    # (6,1): [i-gate; o-gate] preact
    g1t = (jnp.sum(h1b[0:3, :] * slab_ref[0:3, 40:43], axis=1, keepdims=True)
           + slab_ref[0:3, 44:45])                    # (3,1): g-gate preact
    s1 = jax.nn.sigmoid(g1s)                          # (6,1)
    i1, o1 = s1[0:3, :], s1[3:6, :]
    gg1 = jnp.tanh(g1t)                               # (3,1)
    c1 = i1 * gg1
    h2 = o1 * jnp.tanh(c1)                            # (3,1) column  (== y.view(3))

    # ---- MLP head ----
    # fc1: Linear(3,10) + ReLU   (column in -> lane row out)
    z1 = (jnp.sum(jnp.broadcast_to(h2, (3, 10)) * slab_ref[0:3, 48:58],
                  axis=0, keepdims=True)
          + slab_ref[3:4, 48:58])                     # (1,10)
    z1 = jnp.maximum(z1, 0.0)

    # fc2: Linear(10,5) + ReLU   (row in -> column out)
    z2 = (jnp.sum(jnp.broadcast_to(z1, (5, 10)) * slab_ref[0:5, 64:74],
                  axis=1, keepdims=True)
          + slab_ref[0:5, 76:77])                     # (5,1)
    z2 = jnp.maximum(z2, 0.0)

    # fc3: Linear(5,1) + Sigmoid
    z3 = (jnp.sum(z2 * slab_ref[0:5, 80:81], axis=0, keepdims=True)
          + slab_ref[5:6, 80:81])                     # (1,1)
    o_ref[...] = jax.nn.sigmoid(z3)


@jax.jit
def net_forward(x, slab):
    """x: (1, 1, 3) float32 (seq, batch, feature). Returns (1,) like the torch output."""
    xcol = x.reshape(3, 1).astype(jnp.float32)
    # Write x (pre-broadcast along lanes) into the reserved slab block host-side
    # so the kernel has exactly one VMEM input DMA.
    slab = slab.at[0:3, 0:12].set(jnp.broadcast_to(xcol, (3, 12)))
    vmem = pl.BlockSpec(memory_space=pltpu.MemorySpace.VMEM)
    out = pl.pallas_call(
        net_kernel,
        out_shape=jax.ShapeDtypeStruct((1, 1), jnp.float32),
        in_specs=[vmem],
        out_specs=vmem,
    )(slab)
    return out.reshape(1)


def init_params(key):
    """PyTorch-shaped parameters with matching init scales U(-1/sqrt(fan), 1/sqrt(fan))."""
    ks = jax.random.split(key, 14)

    def u(k, shape, bound):
        return jax.random.uniform(k, shape, jnp.float32, -bound, bound)

    kh = 1.0 / math.sqrt(3.0)                 # LSTM hidden_size = 3
    wih0 = u(ks[0], (12, 3), kh)              # weight_ih_l0
    whh0 = u(ks[1], (12, 3), kh)              # weight_hh_l0 (mathematically dead, h0=0)
    bih0 = u(ks[2], (12,), kh)                # bias_ih_l0
    bhh0 = u(ks[3], (12,), kh)                # bias_hh_l0
    wih1 = u(ks[4], (12, 3), kh)              # weight_ih_l1
    whh1 = u(ks[5], (12, 3), kh)              # weight_hh_l1 (dead)
    bih1 = u(ks[6], (12,), kh)                # bias_ih_l1
    bhh1 = u(ks[7], (12,), kh)                # bias_hh_l1

    fw1 = u(ks[8], (10, 3), 1.0 / math.sqrt(3.0))    # Linear(3,10)
    fb1 = u(ks[9], (10,), 1.0 / math.sqrt(3.0))
    fw2 = u(ks[10], (5, 10), 1.0 / math.sqrt(10.0))  # Linear(10,5)
    fb2 = u(ks[11], (5,), 1.0 / math.sqrt(10.0))
    fw3 = u(ks[12], (1, 5), 1.0 / math.sqrt(5.0))    # Linear(5,1)
    fb3 = u(ks[13], (1,), 1.0 / math.sqrt(5.0))

    return (wih0, whh0, bih0, bhh0, wih1, whh1, bih1, bhh1,
            fw1, fb1, fw2, fb2, fw3, fb3)


def pack_params(params):
    """Host-side packing of all live parameters into one (8,128) lane-dense f32 slab."""
    (wih0, _whh0, bih0, bhh0, wih1, _whh1, bih1, bhh1,
     fw1, fb1, fw2, fb2, fw3, fb3) = params
    b0 = bih0 + bhh0                                    # (12,)
    b1 = bih1 + bhh1                                    # (12,)
    slab = jnp.zeros((8, 128), jnp.float32)
    slab = slab.at[0:3, 16:28].set(wih0.T)              # W0T
    slab = slab.at[3:4, 16:28].set(b0.reshape(1, 12))   # B0
    w1sig = jnp.concatenate([wih1[0:3], wih1[9:12]], axis=0)          # [i; o] rows
    b1sig = jnp.concatenate([b1[0:3], b1[9:12]]).reshape(6, 1)
    slab = slab.at[0:6, 32:35].set(w1sig)               # W1SIG
    slab = slab.at[0:6, 36:37].set(b1sig)               # B1SIG
    slab = slab.at[0:3, 40:43].set(wih1[6:9])           # W1TANH (g-gate)
    slab = slab.at[0:3, 44:45].set(b1[6:9].reshape(3, 1))
    slab = slab.at[0:3, 48:58].set(fw1.T)               # FW1T
    slab = slab.at[3:4, 48:58].set(fb1.reshape(1, 10))  # FB1
    slab = slab.at[0:5, 64:74].set(fw2)                 # FW2
    slab = slab.at[0:5, 76:77].set(fb2.reshape(5, 1))   # FB2
    slab = slab.at[0:5, 80:81].set(fw3.reshape(5, 1))   # FW3 column
    slab = slab.at[5:6, 80:81].set(fb3.reshape(1, 1))   # FB3
    return slab


def net_ref(x, params):
    """Pure-JAX reference replicating the PyTorch forward exactly (incl. dead paths)."""
    (wih0, whh0, bih0, bhh0, wih1, whh1, bih1, bhh1,
     fw1, fb1, fw2, fb2, fw3, fb3) = params
    xv = x.reshape(1, 3).astype(jnp.float32)

    def cell(xin, wih, whh, b_ih, b_hh):
        h_prev = jnp.zeros((1, 3), jnp.float32)
        c_prev = jnp.zeros((1, 3), jnp.float32)
        g = xin @ wih.T + h_prev @ whh.T + b_ih + b_hh
        i = jax.nn.sigmoid(g[:, 0:3])
        f = jax.nn.sigmoid(g[:, 3:6])
        gg = jnp.tanh(g[:, 6:9])
        o = jax.nn.sigmoid(g[:, 9:12])
        c = f * c_prev + i * gg
        return o * jnp.tanh(c)

    h1 = cell(xv, wih0, whh0, bih0, bhh0)
    h2 = cell(h1, wih1, whh1, bih1, bhh1)
    z = jnp.maximum(h2 @ fw1.T + fb1, 0.0)
    z = jnp.maximum(z @ fw2.T + fb2, 0.0)
    z = jax.nn.sigmoid(z @ fw3.T + fb3)
    return z.reshape(1)


if __name__ == "__main__":
    key = jax.random.PRNGKey(0)
    pkey, xkey = jax.random.split(key)
    params = init_params(pkey)
    slab = pack_params(params)
    # PyTorch LSTM input layout (seq_len=1, batch=1, input_size=3); y.view(3) needs 1*1*3 elems.
    x = jax.random.normal(xkey, (1, 1, 3), dtype=jnp.float32)

    out = net_forward(x, slab)
    jax.block_until_ready(out)
    assert out.shape == (1,)

    ref = net_ref(x, params)
    assert jnp.allclose(out, ref, atol=1e-5, rtol=1e-5), (out, ref)
    print("KERNEL_OK")
</pallas_src>

<mosaic_0001>
module attributes {stable_mosaic.version = 11 : i64} {
  func.func @net_kernel(%arg0: memref<8x128xf32, #tpu.memory_space<vmem>>, %arg1: memref<1x1xf32, #tpu.memory_space<vmem>>) attributes {dimension_semantics = [], scalar_prefetch = 0 : i64, scratch_operands = 0 : i64, tpu.core_type = #tpu.core_type<tc>} {
    %c0 = arith.constant 0 : index
    %c0_0 = arith.constant 0 : index
    %0 = vector.load %arg0[%c0, %c0_0] : memref<8x128xf32, #tpu.memory_space<vmem>>, vector<3x12xf32>
    %c0_1 = arith.constant 0 : index
    %c16 = arith.constant 16 : index
    %1 = vector.load %arg0[%c0_1, %c16] : memref<8x128xf32, #tpu.memory_space<vmem>>, vector<3x12xf32>
    %c3 = arith.constant 3 : index
    %c16_2 = arith.constant 16 : index
    %2 = vector.load %arg0[%c3, %c16_2] : memref<8x128xf32, #tpu.memory_space<vmem>>, vector<1x12xf32>
    %3 = arith.mulf %0, %1 : vector<3x12xf32>
    %cst = arith.constant dense<0.000000e+00> : vector<12xf32>
    %4 = vector.multi_reduction <add>, %3, %cst [0] : vector<3x12xf32> to vector<12xf32>
    %5 = vector.shape_cast %4 : vector<12xf32> to vector<1x12xf32>
    %6 = arith.addf %5, %2 : vector<1x12xf32>
    %7 = arith.negf %6 : vector<1x12xf32>
    %8 = math.exp %7 : vector<1x12xf32>
    %cst_3 = arith.constant 1.000000e+00 : f32
    %9 = vector.broadcast %cst_3 : f32 to vector<1x12xf32>
    %10 = arith.addf %9, %8 : vector<1x12xf32>
    %11 = arith.divf %9, %10 : vector<1x12xf32>
    %12 = math.tanh %6 : vector<1x12xf32>
    %13 = vector.extract_strided_slice %11 {offsets = [0, 0], sizes = [1, 3], strides = [1, 1]} : vector<1x12xf32> to vector<1x3xf32>
    %14 = vector.extract_strided_slice %12 {offsets = [0, 6], sizes = [1, 3], strides = [1, 1]} : vector<1x12xf32> to vector<1x3xf32>
    %15 = vector.extract_strided_slice %11 {offsets = [0, 9], sizes = [1, 3], strides = [1, 1]} : vector<1x12xf32> to vector<1x3xf32>
    %16 = arith.mulf %13, %14 : vector<1x3xf32>
    %17 = math.tanh %16 : vector<1x3xf32>
    %18 = arith.mulf %15, %17 : vector<1x3xf32>
    %19 = vector.shape_cast %18 : vector<1x3xf32> to vector<1x3xf32>
    %20 = vector.broadcast %19 : vector<1x3xf32> to vector<6x3xf32>
    %c0_4 = arith.constant 0 : index
    %c32 = arith.constant 32 : index
    %21 = vector.load %arg0[%c0_4, %c32] : memref<8x128xf32, #tpu.memory_space<vmem>>, vector<6x3xf32>
    %22 = arith.mulf %20, %21 : vector<6x3xf32>
    %cst_5 = arith.constant dense<0.000000e+00> : vector<6xf32>
    %23 = vector.multi_reduction <add>, %22, %cst_5 [1] : vector<6x3xf32> to vector<6xf32>
    %24 = vector.shape_cast %23 : vector<6xf32> to vector<6x1xf32>
    %c0_6 = arith.constant 0 : index
    %c36 = arith.constant 36 : index
    %25 = vector.load %arg0[%c0_6, %c36] : memref<8x128xf32, #tpu.memory_space<vmem>>, vector<6x1xf32>
    %26 = arith.addf %24, %25 : vector<6x1xf32>
    %27 = vector.extract_strided_slice %20 {offsets = [0, 0], sizes = [3, 3], strides = [1, 1]} : vector<6x3xf32> to vector<3x3xf32>
    %c0_7 = arith.constant 0 : index
    %c40 = arith.constant 40 : index
    %28 = vector.load %arg0[%c0_7, %c40] : memref<8x128xf32, #tpu.memory_space<vmem>>, vector<3x3xf32>
    %29 = arith.mulf %27, %28 : vector<3x3xf32>
    %cst_8 = arith.constant dense<0.000000e+00> : vector<3xf32>
    %30 = vector.multi_reduction <add>, %29, %cst_8 [1] : vector<3x3xf32> to vector<3xf32>
    %31 = vector.shape_cast %30 : vector<3xf32> to vector<3x1xf32>
    %c0_9 = arith.constant 0 : index
    %c44 = arith.constant 44 : index
    %32 = vector.load %arg0[%c0_9, %c44] : memref<8x128xf32, #tpu.memory_space<vmem>>, vector<3x1xf32>
    %33 = arith.addf %31, %32 : vector<3x1xf32>
    %34 = arith.negf %26 : vector<6x1xf32>
    %35 = math.exp %34 : vector<6x1xf32>
    %cst_10 = arith.constant 1.000000e+00 : f32
    %36 = vector.broadcast %cst_10 : f32 to vector<6x1xf32>
    %37 = arith.addf %36, %35 : vector<6x1xf32>
    %38 = arith.divf %36, %37 : vector<6x1xf32>
    %39 = vector.extract_strided_slice %38 {offsets = [0, 0], sizes = [3, 1], strides = [1, 1]} : vector<6x1xf32> to vector<3x1xf32>
    %40 = vector.extract_strided_slice %38 {offsets = [3, 0], sizes = [3, 1], strides = [1, 1]} : vector<6x1xf32> to vector<3x1xf32>
    %41 = math.tanh %33 : vector<3x1xf32>
    %42 = arith.mulf %39, %41 : vector<3x1xf32>
    %43 = math.tanh %42 : vector<3x1xf32>
    %44 = arith.mulf %40, %43 : vector<3x1xf32>
    %45 = vector.shape_cast %44 : vector<3x1xf32> to vector<3x1xf32>
    %46 = vector.broadcast %45 : vector<3x1xf32> to vector<3x10xf32>
    %c0_11 = arith.constant 0 : index
    %c48 = arith.constant 48 : index
    %47 = vector.load %arg0[%c0_11, %c48] : memref<8x128xf32, #tpu.memory_space<vmem>>, vector<3x10xf32>
    %48 = arith.mulf %46, %47 : vector<3x10xf32>
    %cst_12 = arith.constant dense<0.000000e+00> : vector<10xf32>
    %49 = vector.multi_reduction <add>, %48, %cst_12 [0] : vector<3x10xf32> to vector<10xf32>
    %50 = vector.shape_cast %49 : vector<10xf32> to vector<1x10xf32>
    %c3_13 = arith.constant 3 : index
    %c48_14 = arith.constant 48 : index
    %51 = vector.load %arg0[%c3_13, %c48_14] : memref<8x128xf32, #tpu.memory_space<vmem>>, vector<1x10xf32>
    %52 = arith.addf %50, %51 : vector<1x10xf32>
    %cst_15 = arith.constant 0.000000e+00 : f32
    %53 = vector.broadcast %cst_15 : f32 to vector<1x10xf32>
    %54 = arith.maximumf %52, %53 : vector<1x10xf32>
    %55 = vector.shape_cast %54 : vector<1x10xf32> to vector<1x10xf32>
    %56 = vector.broadcast %55 : vector<1x10xf32> to vector<5x10xf32>
    %c0_16 = arith.constant 0 : index
    %c64 = arith.constant 64 : index
    %57 = vector.load %arg0[%c0_16, %c64] : memref<8x128xf32, #tpu.memory_space<vmem>>, vector<5x10xf32>
    %58 = arith.mulf %56, %57 : vector<5x10xf32>
    %cst_17 = arith.constant dense<0.000000e+00> : vector<5xf32>
    %59 = vector.multi_reduction <add>, %58, %cst_17 [1] : vector<5x10xf32> to vector<5xf32>
    %60 = vector.shape_cast %59 : vector<5xf32> to vector<5x1xf32>
    %c0_18 = arith.constant 0 : index
    %c76 = arith.constant 76 : index
    %61 = vector.load %arg0[%c0_18, %c76] : memref<8x128xf32, #tpu.memory_space<vmem>>, vector<5x1xf32>
    %62 = arith.addf %60, %61 : vector<5x1xf32>
    %cst_19 = arith.constant 0.000000e+00 : f32
    %63 = vector.broadcast %cst_19 : f32 to vector<5x1xf32>
    %64 = arith.maximumf %62, %63 : vector<5x1xf32>
    %c0_20 = arith.constant 0 : index
    %c80 = arith.constant 80 : index
    %65 = vector.load %arg0[%c0_20, %c80] : memref<8x128xf32, #tpu.memory_space<vmem>>, vector<5x1xf32>
    %66 = arith.mulf %64, %65 : vector<5x1xf32>
    %cst_21 = arith.constant dense<0.000000e+00> : vector<1xf32>
    %67 = vector.multi_reduction <add>, %66, %cst_21 [0] : vector<5x1xf32> to vector<1xf32>
    %68 = vector.shape_cast %67 : vector<1xf32> to vector<1x1xf32>
    %c5 = arith.constant 5 : index
    %c80_22 = arith.constant 80 : index
    %69 = vector.load %arg0[%c5, %c80_22] : memref<8x128xf32, #tpu.memory_space<vmem>>, vector<1x1xf32>
    %70 = arith.addf %68, %69 : vector<1x1xf32>
    %71 = arith.negf %70 : vector<1x1xf32>
    %72 = math.exp %71 : vector<1x1xf32>
    %cst_23 = arith.constant 1.000000e+00 : f32
    %73 = vector.broadcast %cst_23 : f32 to vector<1x1xf32>
    %74 = arith.addf %73, %72 : vector<1x1xf32>
    %75 = arith.divf %73, %74 : vector<1x1xf32>
    %c0_24 = arith.constant 0 : index
    %c0_25 = arith.constant 0 : index
    %76 = vector.load %arg1[%c0_24, %c0_25] : memref<1x1xf32, #tpu.memory_space<vmem>>, vector<1x1xf32>
    tpu.vector_store %arg1[%c0_24, %c0_25], %75 {strides = array<i32>} : memref<1x1xf32, #tpu.memory_space<vmem>>, vector<1x1xf32>,
    return
  }
}

</mosaic_0001>

<llo_original>
// kernel: net_forward.1
$region0: #{net_forward.1}
  #allocation0 [shape = 'u32[]', space=smem, size = 0x4, offset = 0x4, fixed_abs, tag = 'smem constant byte address 0x4 - core index']
  #allocation1 [shape = 'u32[144,128]{1,0:T(1,128)}', space=vmem, size = 0x12000, scoped, tag = 'internal scratch']
  %s0 = inlined_call_operand.vmem [shape: f32[8,128], index: 0, kind: input, shape index: {}]
  %s1 = inlined_call_operand.hbm [shape: f32[1,1], index: 1, kind: output, shape index: {}]
  %s2 = sld [smem:[#allocation0]]
  $region14: #{net_forward.1} parent=0
    _
  %s4 = ssub.s32 1, %s2
  %s5 = scalar_select 0, %s4, %s2
  $region1: #{net_forward.1} parent=0
    #allocation2 [shape = 'u8[512]{0}', space=vmem, size = 0x400, scoped, tag = 'output window, operand 0, single buffered']
    #allocation3 [shape = 's32[1]{0}', space=sflag, size = 0x4, scoped, tag = 'scoped memory for net_forward.1']
    %6 = vsyncpa [#allocation3], 0
    // Predicated region
    $region2: #{net_forward.1} parent=1 // pred_check
      _
    $region3: #{net_forward.1} parent=1 // pred_check_branch
      %8 = sbr.rel (0) target = $region5
    $region4: #{net_forward.1} parent=1 // pred_region
      _
    $region5: #{net_forward.1} parent=1 // pred_fallthru
      _
    %v9 = vld [vmem:[%s0] sm:$0x7]
    %v10 = vld [vmem:[%s0 + $0x3] sm:$0x1]
    %12 = vrot.lane.b32.xlu0 %v9, 112
    %v13 = vpop.permute.xlu0 %12
    %v15 = vmul.f32 %v9, %v13
    %vm16 = vcmask 92160
    %v17 = vsel %vm16, %v15, 0.0
    %v18 = vrot.slane %v17, 4
    %v19 = vadd.f32 %v17, %v18
    %v20 = vrot.slane %v19, 2
    %v21 = vadd.f32 %v19, %v20
    %v22 = vrot.slane %v21, 1
    %v23 = vadd.f32 %v21, %v22
    %25 = vrot.lane.b32.xlu0 %v10, 112
    %v26 = vpop.permute.xlu0 %25
    %v28 = vadd.f32 %v23, %v26
    %v29 = vxor.u32 %v28, 2147483648
    %v30 = vmul.f32 %v29, 1.442695
    %v31 = vpow.pop %v30
    %v32 = vadd.f32 %v31, 1.0
    %v33 = vrcp.pop %v32
    %v34 = vmul.f32 1.0, %v33
    %v35 = vtanh.pop %v28
    %37 = vrot.lane.b32.xlu0 %v35, 122
    %v38 = vpop.permute.xlu0 %37
    %v40 = vmul.f32 %v34, %v38
    %v41 = vtanh.pop %v40
    %43 = vrot.lane.b32.xlu0 %v41, 9
    %v44 = vpop.permute.xlu0 %43
    %v46 = vmul.f32 %v34, %v44
    %v47 = vlaneseq
    %v48 = vshrl.u32 %v47, 7
    %v49 = vsub.s32 0, %v48
    %v50 = vrot.slane %v46, %v49
    %v51 = vld [vmem:[%s0] sm:$0x3f]
    %53 = vrot.lane.b32.xlu0 %v51, 105
    %v54 = vpop.permute.xlu0 %53
    %v56 = vmul.f32 %v50, %v54
    %58 = vrot.lane.b32.xlu0 %v56, 119
    %v59 = vpop.permute.xlu0 %58
    %vm61 = vcmask 21504
    %v62 = vsel %vm61, %v59, 0.0
    %63 = vadd.xlane.f32.xlu0 %v62
    %v64 = vpop.xlane.xlu0 %63
    %v65 = vadd.f32 %v64, %v51
    %66 = vrot.lane.b32.xlu0 %v9, 97
    %v67 = vpop.permute.xlu0 %66
    %v69 = vmul.f32 %v50, %v67
    %71 = vrot.lane.b32.xlu0 %v69, 119
    %v72 = vpop.permute.xlu0 %71
    %vm74 = vcmask 18432
    %v75 = vsel %vm74, %v72, 0.0
    %76 = vadd.xlane.f32.xlu0 %v75
    %v77 = vpop.xlane.xlu0 %76
    %v78 = vadd.f32 %v77, %v9
    %v79 = vxor.u32 %v65, 2147483648
    %v80 = vmul.f32 %v79, 1.442695
    %v81 = vpow.pop %v80
    %v82 = vadd.f32 %v81, 1.0
    %v83 = vrcp.pop %v82
    %v84 = vmul.f32 1.0, %v83
    %v85 = vtanh.pop %v78
    %87 = vrot.lane.b32.xlu0 %v85, 120
    %v88 = vpop.permute.xlu0 %87
    %v90 = vmul.f32 %v84, %v88
    %v91 = vtanh.pop %v90
    %v93 = vrot.slane %v91, 5
    %v95 = vmul.f32 %v84, %v93
    %97 = vset.pattern.permute.xlu0 36
    %98 = vperm.xlu0 %97, %v95
    %v99 = vpop.permute.xlu0 %98
    %v101 = vrot.slane %v9, 5
    %102 = vrot.lane.b32.xlu0 %v101, 80
    %v103 = vpop.permute.xlu0 %102
    %v105 = vmul.f32 %v99, %v103
    %v107 = vrot.slane %v105, 3
    %vm109 = vcmask 75776
    %v110 = vsel %vm109, %v107, 0.0
    %v111 = vrot.slane %v110, 4
    %v112 = vadd.f32 %v110, %v111
    %v113 = vrot.slane %v112, 2
    %v114 = vadd.f32 %v112, %v113
    %v115 = vrot.slane %v114, 1
    %v116 = vadd.f32 %v114, %v115
    %117 = vrot.lane.b32.xlu0 %v10, 80
    %v118 = vpop.permute.xlu0 %117
    %v120 = vadd.f32 %v116, %v118
    %v121 = vmax.f32 %v120, 0.0
    %v122 = vlaneseq
    %v123 = vshrl.u32 %v122, 7
    %v124 = vsub.s32 0, %v123
    %v125 = vrot.slane %v121, %v124
    %v126 = vld [vmem:[%s0] sm:$0x1f]
    %128 = vrot.lane.b32.xlu0 %v126, 64
    %v129 = vpop.permute.xlu0 %128
    %v131 = vmul.f32 %v125, %v129
    %vm132 = vcmask 77824
    %v133 = vsel %vm132, %v131, 0.0
    %134 = vadd.xlane.f32.xlu0 %v133
    %v135 = vpop.xlane.xlu0 %134
    %v136 = vadd.f32 %v135, %v126
    %v137 = vmax.f32 %v136, 0.0
    %138 = vrot.lane.b32.xlu0 %v126, 124
    %v139 = vpop.permute.xlu0 %138
    %v141 = vmul.f32 %v137, %v139
    %vm142 = vcmask 627296
    %v143 = vsel %vm142, %v141, 0.0
    %v144 = vrot.slane %v143, 4
    %v145 = vadd.f32 %v143, %v144
    %v146 = vrot.slane %v145, 2
    %v147 = vadd.f32 %v145, %v146
    %v148 = vrot.slane %v147, 1
    %v149 = vadd.f32 %v147, %v148
    %v150 = vld [vmem:[%s0 + $0x5] sm:$0x1]
    %152 = vrot.lane.b32.xlu0 %v150, 124
    %v153 = vpop.permute.xlu0 %152
    %v155 = vadd.f32 %v149, %v153
    %v156 = vxor.u32 %v155, 2147483648
    %v157 = vmul.f32 %v156, 1.442695
    %v158 = vpow.pop %v157
    %v159 = vadd.f32 %v158, 1.0
    %v160 = vrcp.pop %v159
    %v161 = vmul.f32 1.0, %v160
    %163 = vrot.lane.b32.xlu0 %v161, 52
    %v164 = vpop.permute.xlu0 %163
    %vm166 = vcmask 0
    %167 = vst.msk [vmem:[#allocation2] sm:$0x1] %vm166, %v164
    // Predicated region
    $region6: #{net_forward.1} parent=1 // pred_check
      _
    $region7: #{net_forward.1} parent=1 // pred_check_branch
      %169 = sbr.rel (0) target = $region9
    $region8: #{net_forward.1} parent=1 // pred_region
      %s171 = ssub.s32 16, 16
      %172 = vsyncadd [#allocation3], %s171
      %s174 = sshll.u32 [#allocation2], 4
      %s175 = int_to_ptr.vmem [resolvable:$true] %s174
      %177 = dma.vmem_to_hbm [thread:$0]  %s175, 16, %s1, [#allocation3]
    $region9: #{net_forward.1} parent=1 // pred_fallthru
      _
    // Predicated region
    $region10: #{net_forward.1} parent=1 // pred_check
      _
    $region11: #{net_forward.1} parent=1 // pred_check_branch
      %179 = sbr.rel (0) target = $region13
    $region12: #{net_forward.1} parent=1 // pred_region
      %180 = dma.done [#allocation3], 16
    $region13: #{net_forward.1} parent=1 // pred_fallthru
      _
    %181 = vsyncpa [#allocation3], 1

</llo_original>
